<compile_context>
chip_gen: v6e
topology: v6e:2x2x1
jax: 0.10.0
libtpu: 0.0.40
codegen_flags: <defaults>
</compile_context>

<pallas_src>
import functools
import math

import jax
import jax.numpy as jnp
import numpy as np
from jax.experimental import pallas as pl
from jax.experimental.pallas import tpu as pltpu


# ----------------------------------------------------------------------------
# Buffer construction (matches nn.Module.__init__ exactly)
# ----------------------------------------------------------------------------
def build_pe_table(max_len: int, d_model: int) -> jnp.ndarray:
    """pe[max_len, d_model]: pe[:,0::2]=sin(pos*div), pe[:,1::2]=cos(pos*div)."""
    position = np.arange(0, max_len, dtype=np.float32)[:, None]              # [L,1]
    div_term = np.exp(
        np.arange(0, d_model, 2, dtype=np.float32) * (-math.log(10000.0) / d_model)
    )                                                                         # [D/2]
    pe = np.zeros((max_len, d_model), dtype=np.float32)
    pe[:, 0::2] = np.sin(position * div_term)
    pe[:, 1::2] = np.cos(position * div_term)
    return jnp.asarray(pe)


# ----------------------------------------------------------------------------
# Pallas kernels
# ----------------------------------------------------------------------------
def _broadcast_pe(pe, batch):
    # pe: (ts, D) -> (ts, B*D), matching x flattened as [S, B*D]
    # (x2[s, b*D + d] = x[s, b, d], so PE is tiled B times along the lane axis).
    if batch > 1:
        pe = jnp.concatenate([pe] * batch, axis=-1)
    return pe


def _posenc_eval_kernel(x_ref, pe_ref, o_ref, *, batch: int):
    # x_ref: (ts, B*D)   pe_ref: (ts, D)   o_ref: (ts, B*D)
    pe = _broadcast_pe(pe_ref[...], batch)          # pe already in x dtype
    o_ref[...] = (x_ref[...] + pe).astype(o_ref.dtype)


def _posenc_train_kernel(seed_ref, x_ref, pe_ref, o_ref, *,
                         batch: int, row_tile: int, p: float):
    # Inverted dropout: keep elements scaled by 1/(1-p).
    keep = 1.0 - p
    pe = _broadcast_pe(pe_ref[...], batch)
    y = x_ref[...] + pe                              # compute in x dtype (bf16-native)

    rows, cols = y.shape
    # Stateless counter-based PRNG: globally-unique element counter mixed with
    # the seed through a splitmix32/murmur3 finalizer.  Works on TPU (VPU int
    # ops) and in interpret mode; no cross-tile or cross-seed structural
    # collisions.
    row_off = (pl.program_id(0) * row_tile).astype(jnp.uint32)
    rid = jax.lax.broadcasted_iota(jnp.int32, (rows, cols), 0).astype(jnp.uint32)
    cid = jax.lax.broadcasted_iota(jnp.int32, (rows, cols), 1).astype(jnp.uint32)
    v = (rid + row_off) * jnp.uint32(cols) + cid
    v = v + seed_ref[0].astype(jnp.uint32) * jnp.uint32(0x9E3779B9)
    v = v ^ (v >> 16)
    v = v * jnp.uint32(0x7FEB352D)
    v = v ^ (v >> 15)
    v = v * jnp.uint32(0x846CA68B)
    v = v ^ (v >> 16)

    # p == 0 is routed to the eval kernel, so keep < 1 here; the clamp to
    # 2^32-1 introduces at most a 1/2^32 bias in keep probability.
    thresh = jnp.uint32(min(int(keep * float(2 ** 32)), 2 ** 32 - 1))
    mask = v < thresh
    # TODO(synk): on v7x, if this ever shows up VALU-bound, draw one u32 per 4
    # elements and compare 8-bit lanes (quantizes p to 1/256).
    o_ref[...] = jnp.where(mask, y * (1.0 / keep), 0.0).astype(o_ref.dtype)


# ----------------------------------------------------------------------------
# Tile / VMEM sizing
# ----------------------------------------------------------------------------
def _vmem_budget(row_tile_bytes=None):
    """(vmem_limit_bytes, per-x-block budget) derived from the actual chip."""
    try:
        cap = int(pltpu.get_tpu_info().vmem_capacity_bytes)
    except Exception:
        cap = 64 * 1024 * 1024          # conservative fallback (v7x per-core VMEM)
    vmem_limit = min((cap * 4) // 5, 100 * 1024 * 1024)   # headroom on every gen
    if row_tile_bytes is None:
        # 2x double-buffered x-in + 2x double-buffered out + pe + headroom.
        row_tile_bytes = vmem_limit // 6
    return vmem_limit, row_tile_bytes


def _choose_row_tile(S, B, D, itemsize, budget_bytes, min_steps=4):
    """Sequence tile: multiple of 8, within the VMEM budget, and small enough
    that the grid has >= min_steps steps (pipelining + v7x megacore)."""
    bytes_per_row = max(1, B * D * itemsize)
    ts = max(8, (budget_bytes // bytes_per_row) // 8 * 8)
    if S > 8:
        steps_cap = max(8, (pl.cdiv(S, min_steps) // 8) * 8)
        ts = min(ts, steps_cap)
    if ts >= S:
        return int(S)                    # single full-extent block
    return int(ts)


# ----------------------------------------------------------------------------
# Wrapper
# ----------------------------------------------------------------------------
def positional_encoding(x, pe_table, *, dropout_p=0.1, training=False, seed=0,
                        row_tile_bytes=None, donate_x=False):
    """x: [S, B, D]. Returns x + pe[:S] (with inverted dropout if training)."""
    S, B, D = x.shape
    max_len, d_model = pe_table.shape
    assert d_model == D and S <= max_len

    # Flatten batch into the lane axis (free reshape of trailing dims): avoids
    # sublane padding when B < 8 and keeps stores lane-dense.
    x2 = x.reshape(S, B * D)
    pe_cast = pe_table.astype(x.dtype)   # cast once; no per-tile casts in-kernel

    vmem_limit, budget = _vmem_budget(row_tile_bytes)
    ts = _choose_row_tile(S, B, D, jnp.dtype(x.dtype).itemsize, budget)
    n_s = pl.cdiv(S, ts)

    out_shape = jax.ShapeDtypeStruct((S, B * D), x.dtype)
    compiler_params = pltpu.CompilerParams(
        dimension_semantics=("parallel",),      # v7x: shard the grid over 2 TCs
        vmem_limit_bytes=vmem_limit,
    )

    if (not training) or dropout_p == 0.0:
        kernel = functools.partial(_posenc_eval_kernel, batch=B)
        grid_spec = pltpu.PrefetchScalarGridSpec(
            num_scalar_prefetch=0,
            grid=(n_s,),
            in_specs=[
                pl.BlockSpec((ts, B * D), lambda i: (i, 0)),
                pl.BlockSpec((ts, D), lambda i: (i, 0)),
            ],
            out_specs=pl.BlockSpec((ts, B * D), lambda i: (i, 0)),
        )
        out2 = pl.pallas_call(
            kernel,
            out_shape=out_shape,
            grid_spec=grid_spec,
            compiler_params=compiler_params,
            input_output_aliases={0: 0} if donate_x else {},
        )(x2, pe_cast)
    else:
        # Training path: seed goes through scalar prefetch (lands in SMEM).
        seed_arr = jnp.asarray([seed], dtype=jnp.int32)
        kernel = functools.partial(_posenc_train_kernel, batch=B, row_tile=ts,
                                   p=float(dropout_p))
        grid_spec = pltpu.PrefetchScalarGridSpec(
            num_scalar_prefetch=1,
            grid=(n_s,),
            in_specs=[
                pl.BlockSpec((ts, B * D), lambda i, _seed: (i, 0)),
                pl.BlockSpec((ts, D), lambda i, _seed: (i, 0)),
            ],
            out_specs=pl.BlockSpec((ts, B * D), lambda i, _seed: (i, 0)),
        )
        out2 = pl.pallas_call(
            kernel,
            out_shape=out_shape,
            grid_spec=grid_spec,
            compiler_params=compiler_params,
            # With scalar prefetch the seed is operand 0 and x is operand 1.
            input_output_aliases={1: 0} if donate_x else {},
        )(seed_arr, x2, pe_cast)

    return out2.reshape(S, B, D)


# ----------------------------------------------------------------------------
# Demo / correctness check
# ----------------------------------------------------------------------------
if __name__ == "__main__":
    d_model = 128          # lane-dense demo width (multiple of 128)
    max_len = 64           # small max_len for the demo (module default is 5000)
    S, B = 16, 2           # -> 2 grid steps even at this tiny size

    pe_table = build_pe_table(max_len, d_model)

    key = jax.random.PRNGKey(0)
    x = jax.random.normal(key, (S, B, d_model), dtype=jnp.float32)

    # Pure-JAX/numpy reference of the forward (eval mode).
    ref = np.asarray(x) + np.asarray(pe_table)[:S][:, None, :]

    # Eval-mode forward (dropout is identity) -- matches torch semantics exactly.
    out = jax.block_until_ready(
        positional_encoding(x, pe_table, dropout_p=0.1, training=False))
    assert out.shape == (S, B, d_model) and out.dtype == jnp.float32
    np.testing.assert_allclose(np.asarray(out), ref, rtol=1e-6, atol=1e-6)

    # bf16 input/output path (native bf16 compute on v6e/v7x; half the HBM bytes).
    out_bf16 = jax.block_until_ready(
        positional_encoding(x.astype(jnp.bfloat16), pe_table, training=False))
    assert out_bf16.dtype == jnp.bfloat16
    np.testing.assert_allclose(np.asarray(out_bf16, dtype=np.float32), ref,
                               rtol=5e-2, atol=5e-2)

    # Training-mode forward (inverted dropout via stateless counter-based PRNG).
    # TODO(synk): dropout mask cannot reproduce torch's RNG stream bit-for-bit.
    p = 0.25
    out_tr = np.asarray(jax.block_until_ready(
        positional_encoding(x, pe_table, dropout_p=p, training=True, seed=123)))
    # Note: an element whose x+pe is exactly 0.0 would be misclassified as
    # dropped here; probability ~0 for random float inputs (test-only heuristic).
    kept = out_tr != 0.0
    frac = kept.mean()
    assert 0.5 < frac < 0.95, f"unexpected keep fraction {frac}"
    np.testing.assert_allclose(out_tr[kept] * (1.0 - p), ref[kept],
                               rtol=1e-5, atol=1e-5)

    print("KERNEL_OK")
</pallas_src>

<mosaic_0001>
module attributes {stable_mosaic.version = 11 : i64} {
  func.func @_posenc_eval_kernel(%arg0: i32, %arg1: memref<8x256xf32, #tpu.memory_space<vmem>>, %arg2: memref<8x128xf32, #tpu.memory_space<vmem>>, %arg3: memref<8x256xf32, #tpu.memory_space<vmem>>) attributes {dimension_semantics = [#tpu.dimension_semantics<parallel>], iteration_bounds = array<i64: 2>, scalar_prefetch = 0 : i64, scratch_operands = 0 : i64, tpu.core_type = #tpu.core_type<tc>, window_params = [{transform_indices = @transform_0, window_bounds = array<i64: 8, 256>}, {transform_indices = @transform_1, window_bounds = array<i64: 8, 128>}, {transform_indices = @transform_2, window_bounds = array<i64: 8, 256>}]} {
    %c0 = arith.constant 0 : index
    %c0_0 = arith.constant 0 : index
    %0 = vector.load %arg2[%c0, %c0_0] : memref<8x128xf32, #tpu.memory_space<vmem>>, vector<8x128xf32>
    %1 = tpu.concatenate %0, %0 in 1 : vector<8x128xf32>, vector<8x128xf32> -> vector<8x256xf32>
    %c0_1 = arith.constant 0 : index
    %c0_2 = arith.constant 0 : index
    %2 = vector.load %arg1[%c0_1, %c0_2] : memref<8x256xf32, #tpu.memory_space<vmem>>, vector<8x256xf32>
    %3 = arith.addf %2, %1 : vector<8x256xf32>
    %c0_3 = arith.constant 0 : index
    %c0_4 = arith.constant 0 : index
    %4 = vector.load %arg3[%c0_3, %c0_4] : memref<8x256xf32, #tpu.memory_space<vmem>>, vector<8x256xf32>
    tpu.vector_store %arg3[%c0_3, %c0_4], %3 {strides = array<i32>} : memref<8x256xf32, #tpu.memory_space<vmem>>, vector<8x256xf32>,
    return
  }
  func.func @transform_0(%arg0: i32) -> (i32, i32) {
    %c0_i32 = arith.constant 0 : i32
    %c0_i32_0 = arith.constant 0 : i32
    return %arg0, %c0_i32 : i32, i32
  }
  func.func @transform_1(%arg0: i32) -> (i32, i32) {
    %c0_i32 = arith.constant 0 : i32
    %c0_i32_0 = arith.constant 0 : i32
    return %arg0, %c0_i32 : i32, i32
  }
  func.func @transform_2(%arg0: i32) -> (i32, i32) {
    %c0_i32 = arith.constant 0 : i32
    %c0_i32_0 = arith.constant 0 : i32
    return %arg0, %c0_i32 : i32, i32
  }
}

</mosaic_0001>

<llo_original>
// kernel: tpu_custom_call.1
$region0: #{tpu_custom_call.1}
  #allocation0 [shape = 'u32[]', space=smem, size = 0x4, offset = 0x4, fixed_abs, tag = 'smem constant byte address 0x4 - core index']
  #allocation1 [shape = 'u32[144,128]{1,0:T(1,128)}', space=vmem, size = 0x12000, scoped, tag = 'internal scratch']
  %s0 = inlined_call_operand.hbm [shape: f32[16,256], index: 0, kind: input, shape index: {}]
  %s1 = inlined_call_operand.hbm [shape: f32[64,128], index: 1, kind: input, shape index: {}]
  %s2 = inlined_call_operand.hbm [shape: f32[16,256], index: 2, kind: output, shape index: {}]
  %s3 = sld [smem:[#allocation0]]
  $region49: #{tpu_custom_call.1} parent=0
    _
  %s5 = ssub.s32 1, %s3
  %s6 = scalar_select 0, %s5, %s3
  $region1: #{tpu_custom_call.1} parent=0
    #allocation2 [shape = 'u8[16384]{0}', space=vmem, size = 0x4000, scoped, tag = 'input window, operand 0']
    #allocation3 [shape = 's32[2]{0}', space=sflag, size = 0x8, scoped, tag = 'scoped memory for tpu_custom_call.1']
    #allocation4 [shape = 's32[2]{0}', space=sflag, size = 0x8, scoped, tag = 'scoped memory for tpu_custom_call.1']
    #allocation5 [shape = 'u8[8192]{0}', space=vmem, size = 0x2000, scoped, tag = 'input window, operand 1']
    #allocation6 [shape = 's32[2]{0}', space=sflag, size = 0x8, scoped, tag = 'scoped memory for tpu_custom_call.1']
    #allocation7 [shape = 'u8[16384]{0}', space=vmem, size = 0x4000, scoped, tag = 'output window, operand 0']
    %7 = vsyncpa [#allocation3], 0
    %s8 = scalar_lea.sflag [#allocation3], 1
    %9 = vsyncpa %s8, 0
    %10 = vsyncpa [#allocation6], 0
    %s11 = scalar_lea.sflag [#allocation6], 1
    %12 = vsyncpa %s11, 0
    %13 = vsyncpa [#allocation4], 0
    %s14 = scalar_lea.sflag [#allocation4], 1
    %15 = vsyncpa %s14, 0
    loop: start=0, step=1, limit=4
    $region2: #{tpu_custom_call.1} parent=1 // loop_pre_header
      _
    $region3: #{tpu_custom_call.1} parent=1 // loop_header
      %s17 = sphi 0, %s21
      %p18 = scmp.ge.s32.totalorder %s17, 4
      %s27 = sphi 0, %s29
      %s30 = sphi 0, %s27
      %s31 = sphi 0, %s30
      %s47 = sphi 0, %s31
      %s53 = sphi 0, %s55
      %s56 = sphi 0, %s53
      %s57 = sphi 0, %s56
      %s73 = sphi 0, %s57
      %s79 = sphi 0, %s81
      %s82 = sphi 0, %s79
      %s83 = sphi 0, %s82
      %s99 = sphi 0, %s83
    $region4: #{tpu_custom_call.1} parent=1 // loop_header_branch
      %20 = sbr.rel (%p18) target = $region8
    $region5: #{tpu_custom_call.1} parent=1 // loop_body
      %s22 = ssub.s32 %s17, 1
      %s23 = ssub.s32 %s17, 2
      %s24 = sadd.s32 %s17, 1
      %s25 = ssub.s32 %s17, %s24
      %p26 = scmp.eq.s32.totalorder %s25, 0
      %s28 = sadd.s32 %s27, 1
      %s29 = scalar_select %p26, %s27, %s28
      %p32 = pneg %p26
      %p33 = scmp.eq.s32.totalorder %s17, 1
      %p34 = por %p32, %p33
      %p35 = scmp.ne.s32.totalorder %s27, %s30
      %p36 = scmp.eq.s32.totalorder %s17, 0
      %p37 = por %p35, %p36
      %p38 = scmp.ne.s32.totalorder %s27, %s30
      %p39 = scmp.eq.s32.totalorder %s22, 1
      %p40 = por %p38, %p39
      %p41 = scmp.ne.s32.totalorder %s30, %s31
      %p42 = scmp.eq.s32.totalorder %s22, 0
      %p43 = por %p41, %p42
      %p44 = scmp.ne.s32.totalorder %s30, %s31
      %p45 = scmp.eq.s32.totalorder %s23, 1
      %p46 = por %p44, %p45
      %p48 = scmp.ne.s32.totalorder %s31, %s47
      %p49 = scmp.eq.s32.totalorder %s23, 0
      %p50 = por %p48, %p49
      %s51 = ssub.s32 %s17, %s24
      %p52 = scmp.eq.s32.totalorder %s51, 0
      %s54 = sadd.s32 %s53, 1
      %s55 = scalar_select %p52, %s53, %s54
      %p58 = pneg %p52
      %p59 = scmp.eq.s32.totalorder %s17, 1
      %p60 = por %p58, %p59
      %p61 = scmp.ne.s32.totalorder %s53, %s56
      %p62 = scmp.eq.s32.totalorder %s17, 0
      %p63 = por %p61, %p62
      %p64 = scmp.ne.s32.totalorder %s53, %s56
      %p65 = scmp.eq.s32.totalorder %s22, 1
      %p66 = por %p64, %p65
      %p67 = scmp.ne.s32.totalorder %s56, %s57
      %p68 = scmp.eq.s32.totalorder %s22, 0
      %p69 = por %p67, %p68
      %p70 = scmp.ne.s32.totalorder %s56, %s57
      %p71 = scmp.eq.s32.totalorder %s23, 1
      %p72 = por %p70, %p71
      %p74 = scmp.ne.s32.totalorder %s57, %s73
      %p75 = scmp.eq.s32.totalorder %s23, 0
      %p76 = por %p74, %p75
      %s77 = ssub.s32 %s17, %s24
      %p78 = scmp.eq.s32.totalorder %s77, 0
      %s80 = sadd.s32 %s79, 1
      %s81 = scalar_select %p78, %s79, %s80
      %p84 = pneg %p78
      %p85 = scmp.eq.s32.totalorder %s17, 1
      %p86 = por %p84, %p85
      %p87 = scmp.ne.s32.totalorder %s79, %s82
      %p88 = scmp.eq.s32.totalorder %s17, 0
      %p89 = por %p87, %p88
      %p90 = scmp.ne.s32.totalorder %s79, %s82
      %p91 = scmp.eq.s32.totalorder %s22, 1
      %p92 = por %p90, %p91
      %p93 = scmp.ne.s32.totalorder %s82, %s83
      %p94 = scmp.eq.s32.totalorder %s22, 0
      %p95 = por %p93, %p94
      %p96 = scmp.ne.s32.totalorder %s82, %s83
      %p97 = scmp.eq.s32.totalorder %s23, 1
      %p98 = por %p96, %p97
      %p100 = scmp.ne.s32.totalorder %s83, %s99
      %p101 = scmp.eq.s32.totalorder %s23, 0
      %p102 = por %p100, %p101
      %p103 = scmp.le.s32.totalorder 1, %s17
      %p104 = scmp.lt.s32.totalorder %s17, 3
      %p105 = pnand %p103, %p104
      %p106 = pneg %p105
      // Predicated region
      $region9: #{tpu_custom_call.1} parent=5 // pred_check
        _
      $region10: #{tpu_custom_call.1} parent=5 // pred_check_branch
        %108 = sbr.rel (%p105) target = $region12
      $region11: #{tpu_custom_call.1} parent=5 // pred_region
        %s109 = ssub.s32 %s17, 1
      $region12: #{tpu_custom_call.1} parent=5 // pred_fallthru
        _
      %p110 = scmp.lt.s32.totalorder %s17, 2
      // Predicated region
      $region13: #{tpu_custom_call.1} parent=5 // pred_check
        %p111 = pneg %p110
      $region14: #{tpu_custom_call.1} parent=5 // pred_check_branch
        %113 = sbr.rel (%p111) target = $region16
      $region15: #{tpu_custom_call.1} parent=5 // pred_region
        // Predicated region
        $region17: #{tpu_custom_call.1} parent=15 // pred_check
          %p114 = pneg %p37
        $region18: #{tpu_custom_call.1} parent=15 // pred_check_branch
          %116 = sbr.rel (%p114) target = $region20
        $region19: #{tpu_custom_call.1} parent=15 // pred_region
          %s117 = sand.u32 %s27, 1
          %s118 = scalar_lea.sflag [#allocation3], %s117
          %s119 = sand.u32 %s27, 1
          %s120 = smul.addr %s119, 16
          %s121 = scalar_lea.vmem [#allocation2], %s120
          %s123 = ssub.s32 256, 256
          %124 = vsyncadd %s118, %s123
          %s125 = smul.addr %s17, 2
          %s126 = smul.addr %s125, 128
          %s127 = scalar_lea.hbm %s0, %s126
          %s129 = sshll.u32 %s121, 4
          %s130 = int_to_ptr.vmem [resolvable:$true] %s129
          %132 = dma.hbm_to_vmem [thread:$0]  %s127, 256, %s130, %s118
        $region20: #{tpu_custom_call.1} parent=15 // pred_fallthru
          _
        // Predicated region
        $region21: #{tpu_custom_call.1} parent=15 // pred_check
          %p133 = pneg %p63
        $region22: #{tpu_custom_call.1} parent=15 // pred_check_branch
          %135 = sbr.rel (%p133) target = $region24
        $region23: #{tpu_custom_call.1} parent=15 // pred_region
          %s136 = sand.u32 %s53, 1
          %s137 = scalar_lea.sflag [#allocation6], %s136
          %s138 = sand.u32 %s53, 1
          %s139 = smul.addr %s138, 8
          %s140 = scalar_lea.vmem [#allocation5], %s139
          %s142 = ssub.s32 128, 128
          %143 = vsyncadd %s137, %s142
          %s144 = smul.addr %s17, 128
          %s145 = scalar_lea.hbm %s1, %s144
          %s147 = sshll.u32 %s140, 4
          %s148 = int_to_ptr.vmem [resolvable:$true] %s147
          %150 = dma.hbm_to_vmem [thread:$0]  %s145, 128, %s148, %s137
        $region24: #{tpu_custom_call.1} parent=15 // pred_fallthru
          _
      $region16: #{tpu_custom_call.1} parent=5 // pred_fallthru
        _
      %p151 = scmp.le.s32.totalorder 1, %s17
      %p152 = scmp.lt.s32.totalorder %s17, 3
      %p153 = pnand %p151, %p152
      %p154 = pneg %p153
      // Predicated region
      $region25: #{tpu_custom_call.1} parent=5 // pred_check
        _
      $region26: #{tpu_custom_call.1} parent=5 // pred_check_branch
        %156 = sbr.rel (%p153) target = $region28
      $region27: #{tpu_custom_call.1} parent=5 // pred_region
        %s157 = ssub.s32 %s17, 1
        %s158 = sand.u32 %s30, 1
        %s159 = scalar_lea.sflag [#allocation3], %s158
        %s160 = sand.u32 %s30, 1
        %s161 = smul.addr %s160, 16
        %s162 = scalar_lea.vmem [#allocation2], %s161
        // Predicated region
        $region29: #{tpu_custom_call.1} parent=27 // pred_check
          %p163 = pneg %p43
        $region30: #{tpu_custom_call.1} parent=27 // pred_check_branch
          %165 = sbr.rel (%p163) target = $region32
        $region31: #{tpu_custom_call.1} parent=27 // pred_region
          %166 = dma.done %s159, 256
        $region32: #{tpu_custom_call.1} parent=27 // pred_fallthru
          _
        %s167 = sand.u32 %s56, 1
        %s168 = scalar_lea.sflag [#allocation6], %s167
        %s169 = sand.u32 %s56, 1
        %s170 = smul.addr %s169, 8
        %s171 = scalar_lea.vmem [#allocation5], %s170
        // Predicated region
        $region33: #{tpu_custom_call.1} parent=27 // pred_check
          %p172 = pneg %p69
        $region34: #{tpu_custom_call.1} parent=27 // pred_check_branch
          %174 = sbr.rel (%p172) target = $region36
        $region35: #{tpu_custom_call.1} parent=27 // pred_region
          %175 = dma.done %s168, 128
        $region36: #{tpu_custom_call.1} parent=27 // pred_fallthru
          _
        %s176 = sand.u32 %s30, 1
        %s177 = scalar_lea.sflag [#allocation3], %s176
        %s178 = sand.u32 %s30, 1
        %s179 = smul.addr %s178, 16
        %s180 = scalar_lea.vmem [#allocation2], %s179
        %p181 = pneg %p43
        %p182 = pneg %p40
        %s183 = sand.u32 %s56, 1
        %s184 = scalar_lea.sflag [#allocation6], %s183
        %s185 = sand.u32 %s56, 1
        %s186 = smul.addr %s185, 8
        %s187 = scalar_lea.vmem [#allocation5], %s186
        %p188 = pneg %p69
        %p189 = pneg %p66
        %p190 = pneg %p95
        %p191 = pneg %p92
        %s192 = sand.u32 %s82, 1
        %s193 = scalar_lea.sflag [#allocation4], %s192
        %s194 = sand.u32 %s82, 1
        %s195 = smul.addr %s194, 16
        %s196 = scalar_lea.vmem [#allocation7], %s195
        %v197 = vld [vmem:[%s171] sm:$0xff]
        %v198 = vld [vmem:[%s162] sm:$0xff]
        %v199 = vld [vmem:[%s162 + $0x8] sm:$0xff]
        %v200 = vadd.f32 %v198, %v197
        %v201 = vadd.f32 %v199, %v197
        %202 = vst [vmem:[%s196] sm:$0xff] %v200
        %203 = vst [vmem:[%s196 + $0x8] sm:$0xff] %v201
        %s204 = sand.u32 %s82, 1
        %s205 = scalar_lea.sflag [#allocation4], %s204
        %s206 = sand.u32 %s82, 1
        %s207 = smul.addr %s206, 16
        %s208 = scalar_lea.vmem [#allocation7], %s207
        // Predicated region
        $region37: #{tpu_custom_call.1} parent=27 // pred_check
          %p209 = pneg %p92
        $region38: #{tpu_custom_call.1} parent=27 // pred_check_branch
          %211 = sbr.rel (%p209) target = $region40
        $region39: #{tpu_custom_call.1} parent=27 // pred_region
          %s213 = ssub.s32 256, 256
          %214 = vsyncadd %s205, %s213
          %s215 = smul.addr %s22, 2
          %s216 = smul.addr %s215, 128
          %s217 = scalar_lea.hbm %s2, %s216
          %s219 = sshll.u32 %s208, 4
          %s220 = int_to_ptr.vmem [resolvable:$true] %s219
          %222 = dma.vmem_to_hbm [thread:$0]  %s220, 256, %s217, %s205
        $region40: #{tpu_custom_call.1} parent=27 // pred_fallthru
          _
      $region28: #{tpu_custom_call.1} parent=5 // pred_fallthru
        _
      %p223 = scmp.le.s32.totalorder 2, %s17
      // Predicated region
      $region41: #{tpu_custom_call.1} parent=5 // pred_check
        %p224 = pneg %p223
      $region42: #{tpu_custom_call.1} parent=5 // pred_check_branch
        %226 = sbr.rel (%p224) target = $region44
      $region43: #{tpu_custom_call.1} parent=5 // pred_region
        %s227 = ssub.s32 %s17, 2
        // Predicated region
        $region45: #{tpu_custom_call.1} parent=43 // pred_check
          %p228 = pneg %p98
        $region46: #{tpu_custom_call.1} parent=43 // pred_check_branch
          %230 = sbr.rel (%p228) target = $region48
        $region47: #{tpu_custom_call.1} parent=43 // pred_region
          %s231 = sand.u32 %s83, 1
          %s232 = scalar_lea.sflag [#allocation4], %s231
          %s233 = sand.u32 %s83, 1
          %s234 = smul.addr %s233, 16
          %s235 = scalar_lea.vmem [#allocation7], %s234
          %236 = dma.done %s232, 256
        $region48: #{tpu_custom_call.1} parent=43 // pred_fallthru
          _
      $region44: #{tpu_custom_call.1} parent=5 // pred_fallthru
        _
    $region6: #{tpu_custom_call.1} parent=1 // loop_footer
      %s21 = sadd.s32 1, %s17
    $region7: #{tpu_custom_call.1} parent=1 // loop_footer_branch
      %16 = sbr.rel target = $region3
    $region8: #{tpu_custom_call.1} parent=1 // loop_exit
      _
    %237 = vsyncpa [#allocation3], 1
    %s238 = scalar_lea.sflag [#allocation3], 1
    %239 = vsyncpa %s238, 1
    %240 = vsyncpa [#allocation6], 1
    %s241 = scalar_lea.sflag [#allocation6], 1
    %242 = vsyncpa %s241, 1
    %243 = vsyncpa [#allocation4], 1
    %s244 = scalar_lea.sflag [#allocation4], 1
    %245 = vsyncpa %s244, 1

</llo_original>
